<compile_context>
chip_gen: v7x
topology: tpu7x:2x2x1
jax: 0.10.0
libtpu: 0.0.40
codegen_flags: <defaults>
</compile_context>

<pallas_src>
import functools

import jax
import jax.numpy as jnp
from jax.experimental import pallas as pl
from jax.experimental.pallas import tpu as pltpu


def _st_kernel(src_ref, locs_ref, out_ref, *, Hs, Ws, sy, sx):
    """One (batch, output-pixel-tile) step of bilinear grid sampling.

    src_ref  : (1, C*Hs, Ws)  source image (NCHW reshaped), resident across the tile axis
    locs_ref : (1, 2, TILE)   grid + flow (channel 0 = row/y, channel 1 = col/x)
    out_ref  : (1, C, TILE)   sampled output
    """
    TILE = locs_ref.shape[2]
    C = out_ref.shape[1]

    locs = locs_ref[0].astype(jnp.float32)                 # (2, TILE)
    # normalize by flow dims + un-normalize by src dims (align_corners=True) collapses
    # to a single scale per axis.
    iy = locs[0:1, :] * sy                                  # (1, TILE) source row coord
    ix = locs[1:2, :] * sx                                  # (1, TILE) source col coord

    iy0f = jnp.floor(iy)
    ix0f = jnp.floor(ix)
    wy1 = iy - iy0f
    wy0 = 1.0 - wy1
    wx1 = ix - ix0f
    wx0 = 1.0 - wx1
    iy0 = iy0f.astype(jnp.int32)
    ix0 = ix0f.astype(jnp.int32)

    # zero padding: fold per-axis validity into the 1-D weights (corner validity is the
    # product of the two axis validities, so this is exact).
    wy0 = jnp.where((iy0 >= 0) & (iy0 <= Hs - 1), wy0, 0.0)
    wy1 = jnp.where((iy0 + 1 >= 0) & (iy0 + 1 <= Hs - 1), wy1, 0.0)
    wx0 = jnp.where((ix0 >= 0) & (ix0 <= Ws - 1), wx0, 0.0)
    wx1 = jnp.where((ix0 + 1 >= 0) & (ix0 + 1 <= Ws - 1), wx1, 0.0)

    # separable weighted one-hot matrices: O((Hs+Ws)*TILE) VPU work.
    col = jax.lax.broadcasted_iota(jnp.int32, (Ws, TILE), 0)
    dx = col - ix0
    rx = jnp.where(dx == 0, wx0, jnp.where(dx == 1, wx1, 0.0))      # (Ws, TILE) f32

    row = jax.lax.broadcasted_iota(jnp.int32, (Hs, TILE), 0)
    dy = row - iy0
    ry = jnp.where(dy == 0, wy0, jnp.where(dy == 1, wy1, 0.0))      # (Hs, TILE) f32

    # MXU: contract the column axis.  src keeps its own dtype (bf16 inputs run the MXU
    # natively in bf16); accumulate in f32.
    src = src_ref[0]                                                # (C*Hs, Ws)
    acc = jnp.dot(src, rx.astype(src.dtype),
                  preferred_element_type=jnp.float32)               # (C*Hs, TILE) f32

    # VPU multiply + sublane reduce: contract the row axis.
    out = jnp.sum(acc.reshape(C, Hs, TILE) * ry[None, :, :], axis=1)  # (C, TILE) f32
    out_ref[0] = out.astype(out_ref.dtype)


def _vmem_capacity_bytes():
    try:
        return int(pltpu.get_tpu_info().vmem_capacity_bytes)
    except Exception:
        return 64 << 20        # conservative (v7x-sized) fallback


def _choose_tile(HW_out, C, Hs, Ws, elt, vmem_cap, src_buffers):
    """Largest multiple-of-128 output-pixel tile whose estimated live VMEM set fits."""
    usable = int(vmem_cap * 0.70)
    src_resident = src_buffers * C * Hs * Ws * elt
    # per-output-pixel live bytes: matmul result + product temp (2*C*Hs f32), rx/ry +
    # iota/delta temps (~3*(Hs+Ws) f32), f32 out temp, double-buffered out/locs blocks.
    per_px = 4 * (2 * C * Hs + 3 * (Hs + Ws) + C + 8) + 2 * C * elt
    avail = usable - src_resident
    tile = avail // per_px if avail > per_px * 128 else 128
    tile = max(128, (int(tile) // 128) * 128)
    hw128 = ((HW_out + 127) // 128) * 128
    return int(min(tile, 2048, hw128))


def spatial_transformer(src, flow, grid, mode="bilinear", tile=None):
    """Pallas TPU implementation of SpatialTransformer.forward (2-D, bilinear,
    align_corners=True, zero padding)."""
    assert mode == "bilinear"
    N, C, Hs, Ws = src.shape
    _, two, Hf, Wf = flow.shape
    assert two == 2 and grid.shape == flow.shape
    HW_in = Hs * Ws
    HW_out = Hf * Wf

    # fold grid + flow once in XLA: drops one (N, 2, HW_out) HBM stream from the kernel.
    locs = (grid.astype(jnp.float32) + flow.astype(jnp.float32)).reshape(N, 2, HW_out)

    # combined normalize (flow dims) + un-normalize (src dims, align_corners=True) scale.
    # (degenerate Hf==1 / Wf==1 is ill-defined in the PyTorch module; mapped to 0 here.)
    sy = (Hs - 1.0) / (Hf - 1.0) if Hf > 1 else 0.0
    sx = (Ws - 1.0) / (Wf - 1.0) if Wf > 1 else 0.0

    elt = jnp.dtype(src.dtype).itemsize
    vmem_cap = _vmem_capacity_bytes()

    # single-buffer the resident source when it is large: its block index only changes
    # with the batch axis, so double-buffering only wastes VMEM (not hit by the tests).
    single_buffer_src = (C * HW_in * elt) > (8 << 20)
    src_buffers = 1 if single_buffer_src else 2

    if tile is None:
        tile = _choose_tile(HW_out, C, Hs, Ws, elt, vmem_cap, src_buffers)
    assert tile % 128 == 0

    # pad the output-pixel axis so every tile is full and stores stay lane-dense.
    HW_pad = ((HW_out + tile - 1) // tile) * tile
    if HW_pad != HW_out:
        locs = jnp.pad(locs, ((0, 0), (0, 0), (0, HW_pad - HW_out)))
    num_tiles = HW_pad // tile

    # NCHW -> (N, C*Hs, Ws) is a pure reshape (no wrapper transpose); the kernel
    # contracts Ws on the MXU and Hs on the VPU.
    src_cf = src.reshape(N, C * Hs, Ws)

    if single_buffer_src:
        src_spec = pl.BlockSpec((1, C * Hs, Ws), lambda b, t: (b, 0, 0),
                                pipeline_mode=pl.Buffered(1))
    else:
        src_spec = pl.BlockSpec((1, C * Hs, Ws), lambda b, t: (b, 0, 0))

    kernel = functools.partial(_st_kernel, Hs=Hs, Ws=Ws, sy=float(sy), sx=float(sx))

    # ~105 MiB on 128-MiB parts (v5e/v6e), ~52 MiB on v7x.
    vmem_limit = max(32 << 20, min(int(vmem_cap * 0.82), vmem_cap - (8 << 20)))

    out_cf = pl.pallas_call(
        kernel,
        out_shape=jax.ShapeDtypeStruct((N, C, HW_pad), src.dtype),
        grid=(N, num_tiles),
        in_specs=[
            src_spec,                                             # resident per batch
            pl.BlockSpec((1, 2, tile), lambda b, t: (b, 0, t)),   # locs tile
        ],
        out_specs=pl.BlockSpec((1, C, tile), lambda b, t: (b, 0, t)),
        compiler_params=pltpu.CompilerParams(
            dimension_semantics=("parallel", "parallel"),
            vmem_limit_bytes=int(vmem_limit)),
    )(src_cf, locs)

    return out_cf[:, :, :HW_out].reshape(N, C, Hf, Wf)


def _reference_forward(src, flow, grid):
    """Pure-JAX reference of the PyTorch forward (direct gather) for validation."""
    N, C, Hs, Ws = src.shape
    Hf, Wf = flow.shape[2], flow.shape[3]
    new0 = 2.0 * ((grid[:, 0] + flow[:, 0]) / (Hf - 1.0) - 0.5)
    new1 = 2.0 * ((grid[:, 1] + flow[:, 1]) / (Wf - 1.0) - 0.5)
    ix = (new1 + 1.0) * 0.5 * (Ws - 1.0)
    iy = (new0 + 1.0) * 0.5 * (Hs - 1.0)
    ix0 = jnp.floor(ix); ix1 = ix0 + 1.0
    iy0 = jnp.floor(iy); iy1 = iy0 + 1.0
    wx1 = ix - ix0; wx0 = 1.0 - wx1
    wy1 = iy - iy0; wy0 = 1.0 - wy1
    b = jnp.arange(N)[:, None, None]

    def gather(yc, xc, w):
        valid = ((xc >= 0) & (xc <= Ws - 1) & (yc >= 0) & (yc <= Hs - 1))
        xi = jnp.clip(xc, 0, Ws - 1).astype(jnp.int32)
        yi = jnp.clip(yc, 0, Hs - 1).astype(jnp.int32)
        vals = src[b, :, yi, xi]                       # (N, Hf, Wf, C)
        return vals * (w * valid.astype(src.dtype))[..., None]

    out = (gather(iy0, ix0, wy0 * wx0) + gather(iy0, ix1, wy0 * wx1) +
           gather(iy1, ix0, wy1 * wx0) + gather(iy1, ix1, wy1 * wx1))
    return jnp.transpose(out, (0, 3, 1, 2))


if __name__ == "__main__":
    key = jax.random.PRNGKey(0)

    def make_inputs(k, N, C, Hs, Ws, Hf=None, Wf=None, flow_scale=1.5):
        Hf = Hs if Hf is None else Hf
        Wf = Ws if Wf is None else Wf
        k_src, k_flow = jax.random.split(k)
        s = jax.random.normal(k_src, (N, C, Hs, Ws), dtype=jnp.float32)
        f = flow_scale * jax.random.normal(k_flow, (N, 2, Hf, Wf), dtype=jnp.float32)
        yy, xx = jnp.meshgrid(jnp.arange(Hf, dtype=jnp.float32),
                              jnp.arange(Wf, dtype=jnp.float32), indexing="ij")
        g = jnp.broadcast_to(jnp.stack([yy, xx], axis=0), (N, 2, Hf, Wf))
        return s, f, g

    k1, k2, k3 = jax.random.split(key, 3)

    # case 1: single-tile path (16x16 -> HW_out = 256)
    src, flow, grid = make_inputs(k1, 2, 4, 16, 16)
    out = spatial_transformer(src, flow, grid)
    jax.block_until_ready(out)
    ref = _reference_forward(src, flow, grid)
    assert out.shape == src.shape
    assert jnp.allclose(out, ref, rtol=1e-3, atol=1e-3), "mismatch vs reference (16x16)"

    # zero flow + identity grid must reproduce the source
    out_id = spatial_transformer(src, jnp.zeros_like(flow), grid)
    jax.block_until_ready(out_id)
    assert jnp.allclose(out_id, src, rtol=1e-3, atol=1e-3), "identity warp mismatch"

    # case 2: multi-tile path (32x32 -> HW_out = 1024, forced tile=128 -> 8 tiles);
    # the source block stays resident across the tile axis.
    src2, flow2, grid2 = make_inputs(k2, 1, 3, 32, 32, flow_scale=2.5)
    out2 = spatial_transformer(src2, flow2, grid2, tile=128)
    jax.block_until_ready(out2)
    ref2 = _reference_forward(src2, flow2, grid2)
    assert jnp.allclose(out2, ref2, rtol=1e-3, atol=1e-3), "mismatch vs reference (32x32)"

    # case 3: output resolution differs from source (16x16 src sampled at 20x20),
    # exercises the non-128-divisible padding + slice path and non-unit scales.
    src3, flow3, grid3 = make_inputs(k3, 1, 2, 16, 16, Hf=20, Wf=20, flow_scale=2.0)
    out3 = spatial_transformer(src3, flow3, grid3)
    jax.block_until_ready(out3)
    ref3 = _reference_forward(src3, flow3, grid3)
    assert out3.shape == (1, 2, 20, 20)
    assert jnp.allclose(out3, ref3, rtol=1e-3, atol=1e-3), "mismatch vs reference (16->20)"

    print("KERNEL_OK")
</pallas_src>

<mosaic_0001>
module attributes {stable_mosaic.version = 11 : i64} {
  func.func @_st_kernel(%arg0: i32, %arg1: i32, %arg2: memref<1x64x16xf32, #tpu.memory_space<vmem>>, %arg3: memref<1x2x256xf32, #tpu.memory_space<vmem>>, %arg4: memref<1x4x256xf32, #tpu.memory_space<vmem>>) attributes {dimension_semantics = [#tpu.dimension_semantics<parallel>, #tpu.dimension_semantics<parallel>], iteration_bounds = array<i64: 2, 1>, scalar_prefetch = 0 : i64, scratch_operands = 0 : i64, tpu.core_type = #tpu.core_type<tc>, window_params = [{transform_indices = @transform_0, window_bounds = array<i64: 1, 64, 16>}, {transform_indices = @transform_1, window_bounds = array<i64: 1, 2, 256>}, {transform_indices = @transform_2, window_bounds = array<i64: 1, 4, 256>}]} {
    %c0 = arith.constant 0 : index
    %c0_0 = arith.constant 0 : index
    %c0_1 = arith.constant 0 : index
    %0 = vector.load %arg3[%c0, %c0_0, %c0_1] : memref<1x2x256xf32, #tpu.memory_space<vmem>>, vector<1x2x256xf32>
    %1 = vector.shape_cast %0 : vector<1x2x256xf32> to vector<2x256xf32>
    %2 = vector.extract_strided_slice %1 {offsets = [0, 0], sizes = [1, 256], strides = [1, 1]} : vector<2x256xf32> to vector<1x256xf32>
    %cst = arith.constant 1.000000e+00 : f32
    %3 = vector.broadcast %cst : f32 to vector<1x256xf32>
    %4 = arith.mulf %2, %3 : vector<1x256xf32>
    %5 = vector.extract_strided_slice %1 {offsets = [1, 0], sizes = [1, 256], strides = [1, 1]} : vector<2x256xf32> to vector<1x256xf32>
    %cst_2 = arith.constant 1.000000e+00 : f32
    %6 = vector.broadcast %cst_2 : f32 to vector<1x256xf32>
    %7 = arith.mulf %5, %6 : vector<1x256xf32>
    %8 = math.floor %4 : vector<1x256xf32>
    %9 = math.floor %7 : vector<1x256xf32>
    %10 = arith.subf %4, %8 : vector<1x256xf32>
    %cst_3 = arith.constant 1.000000e+00 : f32
    %11 = vector.broadcast %cst_3 : f32 to vector<1x256xf32>
    %12 = arith.subf %11, %10 : vector<1x256xf32>
    %13 = arith.subf %7, %9 : vector<1x256xf32>
    %cst_4 = arith.constant 1.000000e+00 : f32
    %14 = vector.broadcast %cst_4 : f32 to vector<1x256xf32>
    %15 = arith.subf %14, %13 : vector<1x256xf32>
    %16 = arith.fptosi %8 : vector<1x256xf32> to vector<1x256xi32>
    %17 = arith.fptosi %9 : vector<1x256xf32> to vector<1x256xi32>
    %c0_i32 = arith.constant 0 : i32
    %18 = vector.broadcast %c0_i32 : i32 to vector<1x256xi32>
    %19 = arith.cmpi sge, %16, %18 : vector<1x256xi32>
    %c15_i32 = arith.constant 15 : i32
    %20 = vector.broadcast %c15_i32 : i32 to vector<1x256xi32>
    %21 = arith.cmpi sle, %16, %20 : vector<1x256xi32>
    %22 = arith.andi %19, %21 : vector<1x256xi1>
    %cst_5 = arith.constant 0.000000e+00 : f32
    %23 = vector.broadcast %cst_5 : f32 to vector<1x256xf32>
    %24 = arith.select %22, %12, %23 : vector<1x256xi1>, vector<1x256xf32>
    %c1_i32 = arith.constant 1 : i32
    %25 = vector.broadcast %c1_i32 : i32 to vector<1x256xi32>
    %26 = arith.addi %16, %25 : vector<1x256xi32>
    %c0_i32_6 = arith.constant 0 : i32
    %27 = vector.broadcast %c0_i32_6 : i32 to vector<1x256xi32>
    %28 = arith.cmpi sge, %26, %27 : vector<1x256xi32>
    %c1_i32_7 = arith.constant 1 : i32
    %29 = vector.broadcast %c1_i32_7 : i32 to vector<1x256xi32>
    %30 = arith.addi %16, %29 : vector<1x256xi32>
    %c15_i32_8 = arith.constant 15 : i32
    %31 = vector.broadcast %c15_i32_8 : i32 to vector<1x256xi32>
    %32 = arith.cmpi sle, %30, %31 : vector<1x256xi32>
    %33 = arith.andi %28, %32 : vector<1x256xi1>
    %cst_9 = arith.constant 0.000000e+00 : f32
    %34 = vector.broadcast %cst_9 : f32 to vector<1x256xf32>
    %35 = arith.select %33, %10, %34 : vector<1x256xi1>, vector<1x256xf32>
    %c0_i32_10 = arith.constant 0 : i32
    %36 = vector.broadcast %c0_i32_10 : i32 to vector<1x256xi32>
    %37 = arith.cmpi sge, %17, %36 : vector<1x256xi32>
    %c15_i32_11 = arith.constant 15 : i32
    %38 = vector.broadcast %c15_i32_11 : i32 to vector<1x256xi32>
    %39 = arith.cmpi sle, %17, %38 : vector<1x256xi32>
    %40 = arith.andi %37, %39 : vector<1x256xi1>
    %cst_12 = arith.constant 0.000000e+00 : f32
    %41 = vector.broadcast %cst_12 : f32 to vector<1x256xf32>
    %42 = arith.select %40, %15, %41 : vector<1x256xi1>, vector<1x256xf32>
    %c1_i32_13 = arith.constant 1 : i32
    %43 = vector.broadcast %c1_i32_13 : i32 to vector<1x256xi32>
    %44 = arith.addi %17, %43 : vector<1x256xi32>
    %c0_i32_14 = arith.constant 0 : i32
    %45 = vector.broadcast %c0_i32_14 : i32 to vector<1x256xi32>
    %46 = arith.cmpi sge, %44, %45 : vector<1x256xi32>
    %c1_i32_15 = arith.constant 1 : i32
    %47 = vector.broadcast %c1_i32_15 : i32 to vector<1x256xi32>
    %48 = arith.addi %17, %47 : vector<1x256xi32>
    %c15_i32_16 = arith.constant 15 : i32
    %49 = vector.broadcast %c15_i32_16 : i32 to vector<1x256xi32>
    %50 = arith.cmpi sle, %48, %49 : vector<1x256xi32>
    %51 = arith.andi %46, %50 : vector<1x256xi1>
    %cst_17 = arith.constant 0.000000e+00 : f32
    %52 = vector.broadcast %cst_17 : f32 to vector<1x256xf32>
    %53 = arith.select %51, %13, %52 : vector<1x256xi1>, vector<1x256xf32>
    %54 = tpu.iota {dimensions = array<i32: 0>} : vector<16x256xi32>
    %55 = vector.broadcast %17 : vector<1x256xi32> to vector<16x256xi32>
    %56 = arith.subi %54, %55 : vector<16x256xi32>
    %c0_i32_18 = arith.constant 0 : i32
    %57 = vector.broadcast %c0_i32_18 : i32 to vector<16x256xi32>
    %58 = arith.cmpi eq, %56, %57 : vector<16x256xi32>
    %c1_i32_19 = arith.constant 1 : i32
    %59 = vector.broadcast %c1_i32_19 : i32 to vector<16x256xi32>
    %60 = arith.cmpi eq, %56, %59 : vector<16x256xi32>
    %cst_20 = arith.constant 0.000000e+00 : f32
    %61 = vector.shape_cast %53 : vector<1x256xf32> to vector<1x256xf32>
    %62 = vector.broadcast %61 : vector<1x256xf32> to vector<16x256xf32>
    %63 = vector.broadcast %cst_20 : f32 to vector<16x256xf32>
    %64 = arith.select %60, %62, %63 : vector<16x256xi1>, vector<16x256xf32>
    %65 = vector.shape_cast %42 : vector<1x256xf32> to vector<1x256xf32>
    %66 = vector.broadcast %65 : vector<1x256xf32> to vector<16x256xf32>
    %67 = arith.select %58, %66, %64 : vector<16x256xi1>, vector<16x256xf32>
    %68 = tpu.iota {dimensions = array<i32: 0>} : vector<16x256xi32>
    %69 = vector.broadcast %16 : vector<1x256xi32> to vector<16x256xi32>
    %70 = arith.subi %68, %69 : vector<16x256xi32>
    %c0_i32_21 = arith.constant 0 : i32
    %71 = vector.broadcast %c0_i32_21 : i32 to vector<16x256xi32>
    %72 = arith.cmpi eq, %70, %71 : vector<16x256xi32>
    %c1_i32_22 = arith.constant 1 : i32
    %73 = vector.broadcast %c1_i32_22 : i32 to vector<16x256xi32>
    %74 = arith.cmpi eq, %70, %73 : vector<16x256xi32>
    %cst_23 = arith.constant 0.000000e+00 : f32
    %75 = vector.shape_cast %35 : vector<1x256xf32> to vector<1x256xf32>
    %76 = vector.broadcast %75 : vector<1x256xf32> to vector<16x256xf32>
    %77 = vector.broadcast %cst_23 : f32 to vector<16x256xf32>
    %78 = arith.select %74, %76, %77 : vector<16x256xi1>, vector<16x256xf32>
    %79 = vector.shape_cast %24 : vector<1x256xf32> to vector<1x256xf32>
    %80 = vector.broadcast %79 : vector<1x256xf32> to vector<16x256xf32>
    %81 = arith.select %72, %80, %78 : vector<16x256xi1>, vector<16x256xf32>
    %c0_24 = arith.constant 0 : index
    %c0_25 = arith.constant 0 : index
    %c0_26 = arith.constant 0 : index
    %82 = vector.load %arg2[%c0_24, %c0_25, %c0_26] : memref<1x64x16xf32, #tpu.memory_space<vmem>>, vector<1x64x16xf32>
    %83 = vector.shape_cast %82 : vector<1x64x16xf32> to vector<64x16xf32>
    %cst_27 = arith.constant dense<0.000000e+00> : vector<64x256xf32>
    %84 = tpu.matmul %83, %67, %cst_27 {dimension_numbers = #tpu.dot_dimension_numbers<[1], [0], [0], [1], [0, 0, 1, 1], [], []>} : vector<64x16xf32>, vector<16x256xf32>, vector<64x256xf32> -> vector<64x256xf32>
    %85 = vector.shape_cast %84 : vector<64x256xf32> to vector<4x16x256xf32>
    %86 = vector.shape_cast %81 : vector<16x256xf32> to vector<1x16x256xf32>
    %87 = vector.broadcast %86 : vector<1x16x256xf32> to vector<4x16x256xf32>
    %88 = arith.mulf %85, %87 : vector<4x16x256xf32>
    %cst_28 = arith.constant dense<0.000000e+00> : vector<4x256xf32>
    %89 = vector.multi_reduction <add>, %88, %cst_28 [1] : vector<4x16x256xf32> to vector<4x256xf32>
    %c0_29 = arith.constant 0 : index
    %c0_30 = arith.constant 0 : index
    %c0_31 = arith.constant 0 : index
    %90 = vector.load %arg4[%c0_29, %c0_30, %c0_31] : memref<1x4x256xf32, #tpu.memory_space<vmem>>, vector<1x4x256xf32>
    %91 = vector.shape_cast %90 : vector<1x4x256xf32> to vector<4x256xf32>
    %92 = vector.shape_cast %89 : vector<4x256xf32> to vector<1x4x256xf32>
    tpu.vector_store %arg4[%c0_29, %c0_30, %c0_31], %92 {strides = array<i32>} : memref<1x4x256xf32, #tpu.memory_space<vmem>>, vector<1x4x256xf32>,
    return
  }
  func.func @transform_0(%arg0: i32, %arg1: i32) -> (i32, i32, i32) {
    %c0_i32 = arith.constant 0 : i32
    %c0_i32_0 = arith.constant 0 : i32
    %c0_i32_1 = arith.constant 0 : i32
    return %arg0, %c0_i32, %c0_i32_0 : i32, i32, i32
  }
  func.func @transform_1(%arg0: i32, %arg1: i32) -> (i32, i32, i32) {
    %c0_i32 = arith.constant 0 : i32
    %c0_i32_0 = arith.constant 0 : i32
    return %arg0, %c0_i32, %arg1 : i32, i32, i32
  }
  func.func @transform_2(%arg0: i32, %arg1: i32) -> (i32, i32, i32) {
    %c0_i32 = arith.constant 0 : i32
    %c0_i32_0 = arith.constant 0 : i32
    return %arg0, %c0_i32, %arg1 : i32, i32, i32
  }
}

</mosaic_0001>

<llo_original>
// kernel: tpu_custom_call.1
$region0: #{tpu_custom_call.1}
  #allocation0 [shape = 'u32[]', space=smem, size = 0x4, offset = 0x4, fixed_abs, tag = 'smem constant byte address 0x4 - core index']
  #allocation1 [shape = 'u32[144,128]{1,0:T(1,128)}', space=vmem, size = 0x12000, scoped, tag = 'internal scratch']
  %s0 = inlined_call_operand.vmem [shape: f32[2,64,16], index: 0, kind: input, shape index: {}]
  %s1 = inlined_call_operand.vmem [shape: f32[2,2,256], index: 1, kind: input, shape index: {}]
  %s2 = inlined_call_operand.hbm [shape: f32[2,4,256], index: 2, kind: output, shape index: {}]
  %s3 = sld [smem:[#allocation0]]
  $region41: #{tpu_custom_call.1} parent=0
    _
  %s5 = ssub.s32 1, %s3
  %s6 = scalar_select 0, %s5, %s3
  $region1: #{tpu_custom_call.1} parent=0
    #allocation2 [shape = 'u8[8192]{0}', space=vmem, size = 0x2000, scoped, tag = 'output window, operand 0']
    #allocation3 [shape = 's32[2]{0}', space=sflag, size = 0x8, scoped, tag = 'scoped memory for tpu_custom_call.1']
    %7 = vsyncpa [#allocation3], 0
    %s8 = scalar_lea.sflag [#allocation3], 1
    %9 = vsyncpa %s8, 0
    loop: start=0, step=1, limit=4
    $region2: #{tpu_custom_call.1} parent=1 // loop_pre_header
      _
    $region3: #{tpu_custom_call.1} parent=1 // loop_header
      %s11 = sphi 0, %s15
      %p12 = scmp.ge.s32.totalorder %s11, 4
      %s18 = sphi 0, %s30
      %s19 = sphi 0, %s26
      %s20 = sphi 0, %s18
      %s21 = sphi 0, %s19
      %s22 = sphi 0, %s20
      %s23 = sphi 0, %s21
      %s33 = sphi 0, %s35
      %s36 = sphi 0, %s33
      %s37 = sphi 0, %s36
      %s53 = sphi 0, %s37
      %s61 = sphi 0, %s63
      %s64 = sphi 0, %s61
      %s65 = sphi 0, %s64
      %s81 = sphi 0, %s65
      %s89 = sphi 0, %s91
      %s92 = sphi 0, %s89
      %s93 = sphi 0, %s92
      %s109 = sphi 0, %s93
    $region4: #{tpu_custom_call.1} parent=1 // loop_header_branch
      %14 = sbr.rel (%p12) target = $region8
    $region5: #{tpu_custom_call.1} parent=1 // loop_body
      %s16 = ssub.s32 %s11, 1
      %s17 = ssub.s32 %s11, 2
      %s24 = sadd.s32 1, %s19
      %p25 = scmp.ge.s32.totalorder %s24, 1
      %s26 = scalar_select %p25, 0, %s24
      %s27 = sadd.s32 1, %s18
      %s28 = scalar_select %p25, %s27, %s18
      %p29 = scmp.ge.s32.totalorder %s28, 2
      %s30 = scalar_select %p29, 0, %s28
      %s31 = ssub.s32 %s18, %s30
      %p32 = scmp.eq.s32.totalorder %s31, 0
      %s34 = sadd.s32 %s33, 1
      %s35 = scalar_select %p32, %s33, %s34
      %p38 = pneg %p32
      %p39 = scmp.eq.s32.totalorder %s11, 1
      %p40 = por %p38, %p39
      %p41 = scmp.ne.s32.totalorder %s33, %s36
      %p42 = scmp.eq.s32.totalorder %s11, 0
      %p43 = por %p41, %p42
      %p44 = scmp.ne.s32.totalorder %s33, %s36
      %p45 = scmp.eq.s32.totalorder %s16, 1
      %p46 = por %p44, %p45
      %p47 = scmp.ne.s32.totalorder %s36, %s37
      %p48 = scmp.eq.s32.totalorder %s16, 0
      %p49 = por %p47, %p48
      %p50 = scmp.ne.s32.totalorder %s36, %s37
      %p51 = scmp.eq.s32.totalorder %s17, 1
      %p52 = por %p50, %p51
      %p54 = scmp.ne.s32.totalorder %s37, %s53
      %p55 = scmp.eq.s32.totalorder %s17, 0
      %p56 = por %p54, %p55
      %s57 = ssub.s32 %s18, %s30
      %s58 = ssub.s32 %s19, %s26
      %s59 = sor.u32 %s57, %s58
      %p60 = scmp.eq.s32.totalorder %s59, 0
      %s62 = sadd.s32 %s61, 1
      %s63 = scalar_select %p60, %s61, %s62
      %p66 = pneg %p60
      %p67 = scmp.eq.s32.totalorder %s11, 1
      %p68 = por %p66, %p67
      %p69 = scmp.ne.s32.totalorder %s61, %s64
      %p70 = scmp.eq.s32.totalorder %s11, 0
      %p71 = por %p69, %p70
      %p72 = scmp.ne.s32.totalorder %s61, %s64
      %p73 = scmp.eq.s32.totalorder %s16, 1
      %p74 = por %p72, %p73
      %p75 = scmp.ne.s32.totalorder %s64, %s65
      %p76 = scmp.eq.s32.totalorder %s16, 0
      %p77 = por %p75, %p76
      %p78 = scmp.ne.s32.totalorder %s64, %s65
      %p79 = scmp.eq.s32.totalorder %s17, 1
      %p80 = por %p78, %p79
      %p82 = scmp.ne.s32.totalorder %s65, %s81
      %p83 = scmp.eq.s32.totalorder %s17, 0
      %p84 = por %p82, %p83
      %s85 = ssub.s32 %s18, %s30
      %s86 = ssub.s32 %s19, %s26
      %s87 = sor.u32 %s85, %s86
      %p88 = scmp.eq.s32.totalorder %s87, 0
      %s90 = sadd.s32 %s89, 1
      %s91 = scalar_select %p88, %s89, %s90
      %p94 = pneg %p88
      %p95 = scmp.eq.s32.totalorder %s11, 1
      %p96 = por %p94, %p95
      %p97 = scmp.ne.s32.totalorder %s89, %s92
      %p98 = scmp.eq.s32.totalorder %s11, 0
      %p99 = por %p97, %p98
      %p100 = scmp.ne.s32.totalorder %s89, %s92
      %p101 = scmp.eq.s32.totalorder %s16, 1
      %p102 = por %p100, %p101
      %p103 = scmp.ne.s32.totalorder %s92, %s93
      %p104 = scmp.eq.s32.totalorder %s16, 0
      %p105 = por %p103, %p104
      %p106 = scmp.ne.s32.totalorder %s92, %s93
      %p107 = scmp.eq.s32.totalorder %s17, 1
      %p108 = por %p106, %p107
      %p110 = scmp.ne.s32.totalorder %s93, %s109
      %p111 = scmp.eq.s32.totalorder %s17, 0
      %p112 = por %p110, %p111
      %p113 = scmp.le.s32.totalorder 1, %s11
      %p114 = scmp.lt.s32.totalorder %s11, 3
      %p115 = pnand %p113, %p114
      %p116 = pneg %p115
      // Predicated region
      $region9: #{tpu_custom_call.1} parent=5 // pred_check
        _
      $region10: #{tpu_custom_call.1} parent=5 // pred_check_branch
        %118 = sbr.rel (%p115) target = $region12
      $region11: #{tpu_custom_call.1} parent=5 // pred_region
        %s119 = ssub.s32 %s11, 1
      $region12: #{tpu_custom_call.1} parent=5 // pred_fallthru
        _
      %p120 = scmp.lt.s32.totalorder %s11, 2
      // Predicated region
      $region13: #{tpu_custom_call.1} parent=5 // pred_check
        %p121 = pneg %p120
      $region14: #{tpu_custom_call.1} parent=5 // pred_check_branch
        %123 = sbr.rel (%p121) target = $region16
      $region15: #{tpu_custom_call.1} parent=5 // pred_region
        // Predicated region
        $region17: #{tpu_custom_call.1} parent=15 // pred_check
          %p124 = pneg %p43
        $region18: #{tpu_custom_call.1} parent=15 // pred_check_branch
          %126 = sbr.rel (%p124) target = $region20
        $region19: #{tpu_custom_call.1} parent=15 // pred_region
          %p127 = scmp.lt.s32.totalorder %s18, 1
          %s128 = scalar_select %p127, %s18, 1
          %s129 = smul.addr %s128, 8
          %s130 = smul.addr %s129, 8
          %s131 = scalar_lea.vmem %s0, %s130
        $region20: #{tpu_custom_call.1} parent=15 // pred_fallthru
          _
        // Predicated region
        $region21: #{tpu_custom_call.1} parent=15 // pred_check
          %p132 = pneg %p71
        $region22: #{tpu_custom_call.1} parent=15 // pred_check_branch
          %134 = sbr.rel (%p132) target = $region24
        $region23: #{tpu_custom_call.1} parent=15 // pred_region
          %s135 = smul.u32 2, %s19
          %p136 = scmp.lt.s32.totalorder %s18, 1
          %s137 = scalar_select %p136, %s18, 1
          %p138 = scmp.lt.s32.totalorder %s135, 1
          %s139 = scalar_select %p138, %s135, 1
          %s140 = smul.addr %s137, 2
          %s141 = sadd.s32 %s139, %s140
          %s142 = smul.addr %s141, 2
          %s143 = scalar_lea.vmem %s1, %s142
          %s144 = smul.u32 2, %s19
        $region24: #{tpu_custom_call.1} parent=15 // pred_fallthru
          _
      $region16: #{tpu_custom_call.1} parent=5 // pred_fallthru
        _
      %p145 = scmp.le.s32.totalorder 1, %s11
      %p146 = scmp.lt.s32.totalorder %s11, 3
      %p147 = pnand %p145, %p146
      %p148 = pneg %p147
      // Predicated region
      $region25: #{tpu_custom_call.1} parent=5 // pred_check
        _
      $region26: #{tpu_custom_call.1} parent=5 // pred_check_branch
        %150 = sbr.rel (%p147) target = $region28
      $region27: #{tpu_custom_call.1} parent=5 // pred_region
        %s151 = ssub.s32 %s11, 1
        %p152 = scmp.lt.s32.totalorder %s20, 1
        %s153 = scalar_select %p152, %s20, 1
        %s154 = smul.addr %s153, 8
        %s155 = smul.addr %s154, 8
        %s156 = scalar_lea.vmem %s0, %s155
        %p157 = pneg %p49
        %p158 = pneg %p46
        %s159 = smul.u32 2, %s21
        %p160 = scmp.lt.s32.totalorder %s20, 1
        %s161 = scalar_select %p160, %s20, 1
        %p162 = scmp.lt.s32.totalorder %s159, 1
        %s163 = scalar_select %p162, %s159, 1
        %s164 = smul.addr %s161, 2
        %s165 = sadd.s32 %s163, %s164
        %s166 = smul.addr %s165, 2
        %s167 = scalar_lea.vmem %s1, %s166
        %p168 = pneg %p77
        %p169 = pneg %p74
        %p170 = pneg %p105
        %p171 = pneg %p102
        %s172 = sand.u32 %s92, 1
        %s173 = scalar_lea.sflag [#allocation3], %s172
        %s174 = sand.u32 %s92, 1
        %s175 = smul.addr %s174, 8
        %s176 = scalar_lea.vmem [#allocation2], %s175
        %p177 = scmp.lt.s32.totalorder %s20, 1
        %s178 = scalar_select %p177, %s20, 1
        %s179 = smul.addr %s178, 8
        %s180 = smul.addr %s179, 8
        %s181 = scalar_lea.vmem %s0, %s180
        %s182 = smul.u32 2, %s21
        %p183 = scmp.lt.s32.totalorder %s20, 1
        %s184 = scalar_select %p183, %s20, 1
        %p185 = scmp.lt.s32.totalorder %s182, 1
        %s186 = scalar_select %p185, %s182, 1
        %s187 = smul.addr %s184, 2
        %s188 = sadd.s32 %s186, %s187
        %s189 = smul.addr %s188, 2
        %s190 = scalar_lea.vmem %s1, %s189
        %s191 = smul.u32 2, %s21
        %s192 = smul.u32 2, %s21
        %v193 = vld [vmem:[%s190] sm:$0xf]
        %v194 = vfloor.f32 %v193
        %v195 = vsub.f32 %v193, %v194
        %v196 = vsub.f32 1.0, %v195
        %v197 = vcvt.f32.s32.to.zero.pseudo %v194
        %vm198 = vcmp.ge.s32.totalorder %v197, 0
        %vm199 = vcmp.le.s32.totalorder %v197, 15
        %vm200 = vmand %vm198, %vm199
        %v201 = vsel %vm200, %v196, 0.0
        %v202 = vadd.s32 %v197, 1
        %vm203 = vcmp.ge.s32.totalorder %v202, 0
        %vm204 = vcmp.le.s32.totalorder %v202, 15
        %vm205 = vmand %vm203, %vm204
        %v206 = vsel %vm205, %v195, 0.0
        %v207 = vlaneseq
        %v208 = vshrl.u32 %v207, 7
        %v209 = vadd.s32 %v208, 8
        %v210 = vlaneseq
        %v211 = vshrl.u32 %v210, 7
        %v212 = vsub.s32 1, %v211
        %v213 = vrot.slane %v197, %v212
        %v214 = vlaneseq
        %v215 = vshrl.u32 %v214, 7
        %v216 = vsub.s32 3, %v215
        %v217 = vrot.slane %v197, %v216
        %v218 = vlaneseq
        %v219 = vshrl.u32 %v218, 7
        %v220 = vsub.s32 1, %v219
        %v221 = vrot.slane %v213, %v220
        %v222 = vlaneseq
        %v223 = vshrl.u32 %v222, 7
        %v224 = vsub.s32 1, %v223
        %v225 = vrot.slane %v217, %v224
        %v226 = vsub.s32 %v208, %v221
        %v227 = vsub.s32 %v208, %v225
        %v228 = vsub.s32 %v209, %v221
        %v229 = vsub.s32 %v209, %v225
        %vm230 = vcmp.eq.s32.totalorder %v226, 0
        %vm231 = vcmp.eq.s32.totalorder %v227, 0
        %vm232 = vcmp.eq.s32.totalorder %v228, 0
        %vm233 = vcmp.eq.s32.totalorder %v229, 0
        %vm234 = vcmp.eq.s32.totalorder %v226, 1
        %vm235 = vcmp.eq.s32.totalorder %v227, 1
        %vm236 = vcmp.eq.s32.totalorder %v228, 1
        %vm237 = vcmp.eq.s32.totalorder %v229, 1
        %v239 = vlaneseq
        %v240 = vshrl.u32 %v239, 7
        %v241 = vsub.s32 1, %v240
        %v242 = vrot.slane %v206, %v241
        %v243 = vlaneseq
        %v244 = vshrl.u32 %v243, 7
        %v245 = vsub.s32 3, %v244
        %v246 = vrot.slane %v206, %v245
        %v249 = vlaneseq
        %v250 = vshrl.u32 %v249, 7
        %v251 = vsub.s32 1, %v250
        %v252 = vrot.slane %v242, %v251
        %v253 = vlaneseq
        %v254 = vshrl.u32 %v253, 7
        %v255 = vsub.s32 1, %v254
        %v256 = vrot.slane %v246, %v255
        %v257 = vsel %vm234, %v252, 0.0
        %v258 = vsel %vm235, %v256, 0.0
        %v259 = vsel %vm236, %v252, 0.0
        %v260 = vsel %vm237, %v256, 0.0
        %v262 = vlaneseq
        %v263 = vshrl.u32 %v262, 7
        %v264 = vsub.s32 1, %v263
        %v265 = vrot.slane %v201, %v264
        %v266 = vlaneseq
        %v267 = vshrl.u32 %v266, 7
        %v268 = vsub.s32 3, %v267
        %v269 = vrot.slane %v201, %v268
        %v272 = vlaneseq
        %v273 = vshrl.u32 %v272, 7
        %v274 = vsub.s32 1, %v273
        %v275 = vrot.slane %v265, %v274
        %v276 = vlaneseq
        %v277 = vshrl.u32 %v276, 7
        %v278 = vsub.s32 1, %v277
        %v279 = vrot.slane %v269, %v278
        %v280 = vsel %vm230, %v275, %v257
        %v281 = vsel %vm231, %v279, %v258
        %v282 = vsel %vm232, %v275, %v259
        %v283 = vsel %vm233, %v279, %v260
        %v284 = vlaneseq
        %v285 = vshrl.u32 %v284, 7
        %v286 = vsub.s32 0, %v285
        %v287 = vrot.slane %v197, %v286
        %v288 = vlaneseq
        %v289 = vshrl.u32 %v288, 7
        %v290 = vsub.s32 2, %v289
        %v291 = vrot.slane %v197, %v290
        %v292 = vlaneseq
        %v293 = vshrl.u32 %v292, 7
        %v294 = vsub.s32 0, %v293
        %v295 = vrot.slane %v287, %v294
        %v296 = vlaneseq
        %v297 = vshrl.u32 %v296, 7
        %v298 = vsub.s32 0, %v297
        %v299 = vrot.slane %v291, %v298
        %v300 = vsub.s32 %v208, %v295
        %v301 = vsub.s32 %v208, %v299
        %v302 = vsub.s32 %v209, %v295
        %v303 = vsub.s32 %v209, %v299
        %vm304 = vcmp.eq.s32.totalorder %v300, 0
        %vm305 = vcmp.eq.s32.totalorder %v301, 0
        %vm306 = vcmp.eq.s32.totalorder %v302, 0
        %vm307 = vcmp.eq.s32.totalorder %v303, 0
        %vm308 = vcmp.eq.s32.totalorder %v300, 1
        %vm309 = vcmp.eq.s32.totalorder %v301, 1
        %vm310 = vcmp.eq.s32.totalorder %v302, 1
        %vm311 = vcmp.eq.s32.totalorder %v303, 1
        %v312 = vlaneseq
        %v313 = vshrl.u32 %v312, 7
        %v314 = vsub.s32 0, %v313
        %v315 = vrot.slane %v206, %v314
        %v316 = vlaneseq
        %v317 = vshrl.u32 %v316, 7
        %v318 = vsub.s32 2, %v317
        %v319 = vrot.slane %v206, %v318
        %v322 = vlaneseq
        %v323 = vshrl.u32 %v322, 7
        %v324 = vsub.s32 0, %v323
        %v325 = vrot.slane %v315, %v324
        %v326 = vlaneseq
        %v327 = vshrl.u32 %v326, 7
        %v328 = vsub.s32 0, %v327
        %v329 = vrot.slane %v319, %v328
        %v330 = vsel %vm308, %v325, 0.0
        %v331 = vsel %vm309, %v329, 0.0
        %v332 = vsel %vm310, %v325, 0.0
        %v333 = vsel %vm311, %v329, 0.0
        %v334 = vlaneseq
        %v335 = vshrl.u32 %v334, 7
        %v336 = vsub.s32 0, %v335
        %v337 = vrot.slane %v201, %v336
        %v338 = vlaneseq
        %v339 = vshrl.u32 %v338, 7
        %v340 = vsub.s32 2, %v339
        %v341 = vrot.slane %v201, %v340
        %v344 = vlaneseq
        %v345 = vshrl.u32 %v344, 7
        %v346 = vsub.s32 0, %v345
        %v347 = vrot.slane %v337, %v346
        %v348 = vlaneseq
        %v349 = vshrl.u32 %v348, 7
        %v350 = vsub.s32 0, %v349
        %v351 = vrot.slane %v341, %v350
        %v352 = vsel %vm304, %v347, %v330
        %v353 = vsel %vm305, %v351, %v331
        %v354 = vsel %vm306, %v347, %v332
        %v355 = vsel %vm307, %v351, %v333
        %v356 = vld [vmem:[%s181] sm:$0xff]
        %v357 = vld [vmem:[%s181 + $0x8] sm:$0xff]
        %v358 = vld [vmem:[%s181 + $0x10] sm:$0xff]
        %v359 = vld [vmem:[%s181 + $0x18] sm:$0xff]
        %v360 = vld [vmem:[%s181 + $0x20] sm:$0xff]
        %v361 = vld [vmem:[%s181 + $0x28] sm:$0xff]
        %v362 = vld [vmem:[%s181 + $0x30] sm:$0xff]
        %v363 = vld [vmem:[%s181 + $0x38] sm:$0xff]
        %vm364 = vcmask 130048
        %v366 = vsel %vm364, %v356, 0
        %v369 = vsel %vm364, %v357, 0
        %v372 = vsel %vm364, %v358, 0
        %v375 = vsel %vm364, %v359, 0
        %v378 = vsel %vm364, %v360, 0
        %v381 = vsel %vm364, %v361, 0
        %v384 = vsel %vm364, %v362, 0
        %v387 = vsel %vm364, %v363, 0
        %389 = vmatprep.subr.mxu0 %v281
        %390 = vmatpush1.msra.mxu0 %v280
        %391 = vmatprep.subr.mxu0 %v283
        %392 = vmatpush1.msra.mxu0 %v282
        %393 = vmatprep.subr.mxu0 0.0
        %394 = vmatpush1.msra.mxu0 0.0
        %395 = vmatprep.subr.mxu0 0.0
        %396 = vmatpush1.msra.mxu0 0.0
        %397 = vmatprep.subr.mxu0 0.0
        %398 = vmatpush1.msra.mxu0 0.0
        %399 = vmatprep.subr.mxu0 0.0
        %400 = vmatpush1.msra.mxu0 0.0
        %401 = vmatprep.subr.mxu0 0.0
        %402 = vmatpush1.msra.mxu0 0.0
        %403 = vmatprep.subr.mxu0 0.0
        %404 = vmatpush1.msra.mxu0 0.0
        %405 = vmatprep.subr.mxu0 0.0
        %406 = vmatpush1.msra.mxu0 0.0
        %407 = vmatprep.subr.mxu0 0.0
        %408 = vmatpush1.msra.mxu0 0.0
        %409 = vmatprep.subr.mxu0 0.0
        %410 = vmatpush1.msra.mxu0 0.0
        %411 = vmatprep.subr.mxu0 0.0
        %412 = vmatpush1.msra.mxu0 0.0
        %413 = vmatprep.subr.mxu0 0.0
        %414 = vmatpush1.msra.mxu0 0.0
        %415 = vmatprep.subr.mxu0 0.0
        %416 = vmatpush1.msra.mxu0 0.0
        %417 = vmatprep.subr.mxu0 0.0
        %418 = vmatpush1.msra.mxu0 0.0
        %419 = vmatprep.subr.mxu0 0.0
        %420 = vmatpush1.msra.mxu0 0.0
        %421 = vmatprep.subr.mxu0 0.0
        %422 = vmatpush1.msra.mxu0 0.0
        %423 = vmatprep.subr.mxu0 0.0
        %424 = vmatpush1.msra.mxu0 0.0
        %425 = vmatprep.subr.mxu0 0.0
        %426 = vmatpush1.msra.mxu0 0.0
        %427 = vmatprep.subr.mxu0 0.0
        %428 = vmatpush1.msra.mxu0 0.0
        %429 = vmatprep.subr.mxu0 0.0
        %430 = vmatpush1.msra.mxu0 0.0
        %431 = vmatprep.subr.mxu0 0.0
        %432 = vmatpush1.msra.mxu0 0.0
        %433 = vmatprep.subr.mxu0 0.0
        %434 = vmatpush1.msra.mxu0 0.0
        %435 = vmatprep.subr.mxu0 0.0
        %436 = vmatpush1.msra.mxu0 0.0
        %437 = vmatprep.subr.mxu0 0.0
        %438 = vmatpush1.msra.mxu0 0.0
        %439 = vmatprep.subr.mxu0 0.0
        %440 = vmatpush1.msra.mxu0 0.0
        %441 = vmatprep.subr.mxu0 0.0
        %442 = vmatpush1.msra.mxu0 0.0
        %443 = vmatprep.subr.mxu0 0.0
        %444 = vmatpush1.msra.mxu0 0.0
        %445 = vmatprep.subr.mxu0 0.0
        %446 = vmatpush1.msra.mxu0 0.0
        %447 = vmatprep.subr.mxu0 0.0
        %448 = vmatpush1.msra.mxu0 0.0
        %449 = vmatprep.subr.mxu0 0.0
        %450 = vmatpush1.msra.mxu0 0.0
        %451 = vmatprep.subr.mxu0 0.0
        %452 = vmatpush1.msra.mxu0 0.0
        %453 = vmatprep.mubr.f32.mxu0 0.0
        %454 = vmatmul.mubr.f32.gmra.mrb[0].mxu0 %v366
        %v455 = vpop.f32.mrb[0].mxu0
        %v456 = vadd.f32 0.0, %v455
        %v457 = vpop.f32.mrb[0].mxu0
        %v458 = vadd.f32 0.0, %v457
        %459 = vmatprep.mubr.f32.mxu0 0.0
        %460 = vmatmul.mubr.f32.gmra.mrb[0].mxu0 %v369
        %v461 = vpop.f32.mrb[0].mxu0
        %v462 = vadd.f32 0.0, %v461
        %v463 = vpop.f32.mrb[0].mxu0
        %v464 = vadd.f32 0.0, %v463
        %465 = vmatprep.mubr.f32.mxu0 0.0
        %466 = vmatmul.mubr.f32.gmra.mrb[0].mxu0 %v372
        %v467 = vpop.f32.mrb[0].mxu0
        %v468 = vadd.f32 0.0, %v467
        %v469 = vpop.f32.mrb[0].mxu0
        %v470 = vadd.f32 0.0, %v469
        %471 = vmatprep.mubr.f32.mxu0 0.0
        %472 = vmatmul.mubr.f32.gmra.mrb[0].mxu0 %v375
        %v473 = vpop.f32.mrb[0].mxu0
        %v474 = vadd.f32 0.0, %v473
        %v475 = vpop.f32.mrb[0].mxu0
        %v476 = vadd.f32 0.0, %v475
        %477 = vmatprep.mubr.f32.mxu0 0.0
        %478 = vmatmul.mubr.f32.gmra.mrb[0].mxu0 %v378
        %v479 = vpop.f32.mrb[0].mxu0
        %v480 = vadd.f32 0.0, %v479
        %v481 = vpop.f32.mrb[0].mxu0
        %v482 = vadd.f32 0.0, %v481
        %483 = vmatprep.mubr.f32.mxu0 0.0
        %484 = vmatmul.mubr.f32.gmra.mrb[0].mxu0 %v381
        %v485 = vpop.f32.mrb[0].mxu0
        %v486 = vadd.f32 0.0, %v485
        %v487 = vpop.f32.mrb[0].mxu0
        %v488 = vadd.f32 0.0, %v487
        %489 = vmatprep.mubr.f32.mxu0 0.0
        %490 = vmatmul.mubr.f32.gmra.mrb[0].mxu0 %v384
        %v491 = vpop.f32.mrb[0].mxu0
        %v492 = vadd.f32 0.0, %v491
        %v493 = vpop.f32.mrb[0].mxu0
        %v494 = vadd.f32 0.0, %v493
        %495 = vmatprep.mubr.f32.mxu0 0.0
        %496 = vmatmul.mubr.f32.gmra.mrb[0].mxu0 %v387
        %v497 = vpop.f32.mrb[0].mxu0
        %v498 = vadd.f32 0.0, %v497
        %v499 = vpop.f32.mrb[0].mxu0
        %v500 = vadd.f32 0.0, %v499
        %501 = vdwg.mxu0
        %v502 = vmul.f32 %v456, %v352
        %v503 = vmul.f32 %v458, %v353
        %v504 = vmul.f32 %v462, %v354
        %v505 = vmul.f32 %v464, %v355
        %v506 = vmul.f32 %v468, %v352
        %v507 = vmul.f32 %v470, %v353
        %v508 = vmul.f32 %v474, %v354
        %v509 = vmul.f32 %v476, %v355
        %v510 = vmul.f32 %v480, %v352
        %v511 = vmul.f32 %v482, %v353
        %v512 = vmul.f32 %v486, %v354
        %v513 = vmul.f32 %v488, %v355
        %v514 = vmul.f32 %v492, %v352
        %v515 = vmul.f32 %v494, %v353
        %v516 = vmul.f32 %v498, %v354
        %v517 = vmul.f32 %v500, %v355
        %v518 = vadd.f32 %v502, %v504
        %v519 = vrot.slane %v518, 4
        %v520 = vadd.f32 %v518, %v519
        %v521 = vrot.slane %v520, 2
        %v522 = vadd.f32 %v520, %v521
        %v523 = vrot.slane %v522, 1
        %v524 = vadd.f32 %v522, %v523
        %v525 = vadd.f32 %v503, %v505
        %v526 = vrot.slane %v525, 4
        %v527 = vadd.f32 %v525, %v526
        %v528 = vrot.slane %v527, 2
        %v529 = vadd.f32 %v527, %v528
        %v530 = vrot.slane %v529, 1
        %v531 = vadd.f32 %v529, %v530
        %v532 = vadd.f32 %v506, %v508
        %v533 = vrot.slane %v532, 4
        %v534 = vadd.f32 %v532, %v533
        %v535 = vrot.slane %v534, 2
        %v536 = vadd.f32 %v534, %v535
        %v537 = vrot.slane %v536, 1
        %v538 = vadd.f32 %v536, %v537
        %v539 = vadd.f32 %v507, %v509
        %v540 = vrot.slane %v539, 4
        %v541 = vadd.f32 %v539, %v540
        %v542 = vrot.slane %v541, 2
        %v543 = vadd.f32 %v541, %v542
        %v544 = vrot.slane %v543, 1
        %v545 = vadd.f32 %v543, %v544
        %v546 = vadd.f32 %v510, %v512
        %v547 = vrot.slane %v546, 4
        %v548 = vadd.f32 %v546, %v547
        %v549 = vrot.slane %v548, 2
        %v550 = vadd.f32 %v548, %v549
        %v551 = vrot.slane %v550, 1
        %v552 = vadd.f32 %v550, %v551
        %v553 = vadd.f32 %v511, %v513
        %v554 = vrot.slane %v553, 4
        %v555 = vadd.f32 %v553, %v554
        %v556 = vrot.slane %v555, 2
        %v557 = vadd.f32 %v555, %v556
        %v558 = vrot.slane %v557, 1
        %v559 = vadd.f32 %v557, %v558
        %v560 = vadd.f32 %v514, %v516
        %v561 = vrot.slane %v560, 4
        %v562 = vadd.f32 %v560, %v561
        %v563 = vrot.slane %v562, 2
        %v564 = vadd.f32 %v562, %v563
        %v565 = vrot.slane %v564, 1
        %v566 = vadd.f32 %v564, %v565
        %v567 = vadd.f32 %v515, %v517
        %v568 = vrot.slane %v567, 4
        %v569 = vadd.f32 %v567, %v568
        %v570 = vrot.slane %v569, 2
        %v571 = vadd.f32 %v569, %v570
        %v572 = vrot.slane %v571, 1
        %v573 = vadd.f32 %v571, %v572
        %v582 = vcombine.low %v524, %v531
        %v583 = vcombine.low %v538, %v545
        %v584 = vcombine.low %v552, %v559
        %v585 = vcombine.low %v566, %v573
        %v586 = vrot.slane %v583, 7
        %vm587 = vcmask 1041409
        %v588 = vsel %vm587, %v586, %v582
        %vm589 = vcmask 1045509
        %v590 = vsel %vm589, %v586, %v588
        %v591 = vrot.slane %v584, 6
        %vm592 = vcmask 1042434
        %v593 = vsel %vm592, %v591, %v590
        %vm594 = vcmask 1046534
        %v595 = vsel %vm594, %v591, %v593
        %v596 = vrot.slane %v585, 5
        %vm597 = vcmask 1043459
        %v598 = vsel %vm597, %v596, %v595
        %vm599 = vcmask 1047559
        %v600 = vsel %vm599, %v596, %v598
        %602 = vst [vmem:[%s176] sm:$0xff] %v600
        %s603 = sand.u32 %s92, 1
        %s604 = scalar_lea.sflag [#allocation3], %s603
        %s605 = sand.u32 %s92, 1
        %s606 = smul.addr %s605, 8
        %s607 = scalar_lea.vmem [#allocation2], %s606
        // Predicated region
        $region29: #{tpu_custom_call.1} parent=27 // pred_check
          %p608 = pneg %p102
        $region30: #{tpu_custom_call.1} parent=27 // pred_check_branch
          %610 = sbr.rel (%p608) target = $region32
        $region31: #{tpu_custom_call.1} parent=27 // pred_region
          %s611 = smul.u32 2, %s21
          %s613 = ssub.s32 128, 128
          %614 = vsyncadd %s604, %s613
          %s615 = smul.addr %s20, 2
          %s616 = sadd.s32 %s611, %s615
          %s617 = smul.addr %s616, 64
          %s618 = scalar_lea.hbm %s2, %s617
          %s620 = sshll.u32 %s607, 4
          %s621 = int_to_ptr.vmem [resolvable:$true] %s620
          %623 = dma.vmem_to_hbm [thread:$0]  %s621, 128, %s618, %s604
        $region32: #{tpu_custom_call.1} parent=27 // pred_fallthru
          _
      $region28: #{tpu_custom_call.1} parent=5 // pred_fallthru
        _
      %p624 = scmp.le.s32.totalorder 2, %s11
      // Predicated region
      $region33: #{tpu_custom_call.1} parent=5 // pred_check
        %p625 = pneg %p624
      $region34: #{tpu_custom_call.1} parent=5 // pred_check_branch
        %627 = sbr.rel (%p625) target = $region36
      $region35: #{tpu_custom_call.1} parent=5 // pred_region
        %s628 = ssub.s32 %s11, 2
        // Predicated region
        $region37: #{tpu_custom_call.1} parent=35 // pred_check
          %p629 = pneg %p108
        $region38: #{tpu_custom_call.1} parent=35 // pred_check_branch
          %631 = sbr.rel (%p629) target = $region40
        $region39: #{tpu_custom_call.1} parent=35 // pred_region
          %s632 = sand.u32 %s93, 1
          %s633 = scalar_lea.sflag [#allocation3], %s632
          %s634 = sand.u32 %s93, 1
          %s635 = smul.addr %s634, 8
          %s636 = scalar_lea.vmem [#allocation2], %s635
          %637 = dma.done %s633, 128
        $region40: #{tpu_custom_call.1} parent=35 // pred_fallthru
          _
      $region36: #{tpu_custom_call.1} parent=5 // pred_fallthru
        _
    $region6: #{tpu_custom_call.1} parent=1 // loop_footer
      %s15 = sadd.s32 1, %s11
    $region7: #{tpu_custom_call.1} parent=1 // loop_footer_branch
      %10 = sbr.rel target = $region3
    $region8: #{tpu_custom_call.1} parent=1 // loop_exit
      _
    %638 = vsyncpa [#allocation3], 1
    %s639 = scalar_lea.sflag [#allocation3], 1
    %640 = vsyncpa %s639, 1

</llo_original>
